<compile_context>
chip_gen: v7x
topology: tpu7x:2x2x1
jax: 0.10.0
libtpu: 0.0.40
codegen_flags: <defaults>
</compile_context>

<pallas_src>
from functools import partial

import numpy as np
import jax
import jax.numpy as jnp
from jax.experimental import pallas as pl
from jax.experimental.pallas import tpu as pltpu


def _round_up(x, m):
    return ((x + m - 1) // m) * m


def _mlp_edge_kernel(x_ref, w1_ref, b1_ref, w2_ref, o_ref):
    # x_ref:  [TE, 2D]   fused (src|dst) edge embeddings, compute dtype
    # w1_ref: [2D, Hp]   first-layer weight (hidden zero-padded + bias lane), compute dtype
    # b1_ref: [1, Hp]    f32 bias; lane H holds the constant 1.0 "bias lane"
    # w2_ref: [1, Hp]    f32 second-layer weight row; lane H holds b2
    # o_ref:  [1, 1, TE] lane-dense f32 logits for this edge tile
    h = jnp.dot(x_ref[...], w1_ref[...], preferred_element_type=jnp.float32)
    h = jnp.maximum(h + b1_ref[...], 0.0)                 # f32 bias + ReLU
    # Second layer (Hp -> 1) as VPU multiply + lane reduce; padded lanes contribute 0
    # and the bias lane contributes exactly b2.  Lane-dense store into (1, 1, TE).
    o = jnp.sum(h * w2_ref[...], axis=-1)                 # [TE]
    o_ref[...] = o.reshape(o_ref.shape).astype(o_ref.dtype)


@partial(jax.jit, static_argnames=("edge_tile", "compute_dtype"))
def mlp_edge_logits_pallas(node_emb, src, dst, w1_k, b1_pad, w2_row, *,
                           edge_tile=8192, compute_dtype=jnp.bfloat16):
    """Fused (gather+concat -> Linear -> ReLU -> Linear) edge logits."""
    E = src.shape[0]
    N, D = node_emb.shape
    K2, Hp = w1_k.shape                      # K2 == 2*D, Hp multiple of 128
    in_itemsize = jnp.dtype(compute_dtype).itemsize
    lane_x = _round_up(K2, 128)              # VMEM lane padding of the edge tile

    # --- edge tile: multiple of 128, as large as the VMEM budget allows ----------
    TE = max(128, min(int(edge_tile), _round_up(max(E, 1), 128)))
    TE = _round_up(TE, 128)

    def _vmem_need(te):
        return (2 * te * lane_x * in_itemsize              # fused edge tile, double-buffered
                + 2 * te * 4                               # output row, double-buffered (f32)
                + 2 * _round_up(K2, 8) * Hp * in_itemsize  # W1 (2 buffers, VMEM-resident)
                + 4 * 8 * Hp * 4)                          # b1 + w2 rows

    VMEM_BUDGET = 48 * (1 << 20)             # leaves headroom inside v7x's 64 MiB VMEM
    while TE > 128 and _vmem_need(TE) > VMEM_BUDGET:
        TE = max(128, _round_up(TE // 2, 128))

    E_pad = _round_up(max(E, 1), TE)
    G = E_pad // TE

    # --- fused gather + concat + cast: ONE [E_pad, 2D] producer ------------------
    pad = E_pad - E
    src_p = jnp.pad(src, (0, pad)) if pad else src     # pad tiny index vectors only
    dst_p = jnp.pad(dst, (0, pad)) if pad else dst
    x = jnp.concatenate([node_emb[src_p], node_emb[dst_p]], axis=1)
    x = x.astype(compute_dtype)                        # [E_pad, 2D] single stream

    flops = 2 * E_pad * K2 * Hp + 2 * E_pad * Hp
    bytes_accessed = (E_pad * K2 * in_itemsize         # fused edge stream
                      + K2 * Hp * in_itemsize          # W1
                      + 2 * Hp * 4                     # b1, w2 row
                      + E_pad * 4)                     # logits

    vmem_limit = int(min(56 * (1 << 20),
                         max(32 * (1 << 20), _vmem_need(TE) + (8 << 20))))

    out = pl.pallas_call(
        _mlp_edge_kernel,
        out_shape=jax.ShapeDtypeStruct((G, 1, TE), jnp.float32),
        grid_spec=pltpu.PrefetchScalarGridSpec(
            num_scalar_prefetch=0,
            grid=(G,),
            in_specs=[
                pl.BlockSpec((TE, K2), lambda i: (i, 0)),   # fused edge tile
                pl.BlockSpec((K2, Hp), lambda i: (0, 0)),   # W1 (VMEM-resident)
                pl.BlockSpec((1, Hp), lambda i: (0, 0)),    # b1 (+ bias lane)
                pl.BlockSpec((1, Hp), lambda i: (0, 0)),    # w2 row (+ b2 lane)
            ],
            out_specs=pl.BlockSpec((1, 1, TE), lambda i: (i, 0, 0)),
        ),
        compiler_params=pltpu.CompilerParams(
            dimension_semantics=("parallel",),
            vmem_limit_bytes=vmem_limit),
        cost_estimate=pl.CostEstimate(flops=flops, transcendentals=0,
                                      bytes_accessed=bytes_accessed),
    )(x, w1_k, b1_pad, w2_row)

    # b2 already folded in-kernel; only drop the tail padding here.
    return out.reshape(E_pad, 1)[:E]


def xavier_uniform(key, fan_in, fan_out, dtype=jnp.float32):
    # Matches torch.nn.init.xavier_uniform_ (gain=1.0); stored as (in, out).
    limit = float(np.sqrt(6.0 / (fan_in + fan_out)))
    return jax.random.uniform(key, (fan_in, fan_out), dtype=dtype,
                              minval=-limit, maxval=limit)


class MLPPallas:
    """JAX/Pallas port of the PyTorch MLP edge model."""

    def __init__(self, input_dim, mlp_edge_model_dim=32, *, key,
                 compute_dtype=jnp.bfloat16):
        self.input_dim = int(input_dim)
        self.hidden_dim = int(mlp_edge_model_dim)
        self.compute_dtype = compute_dtype

        D, H = self.input_dim, self.hidden_dim
        # Pad hidden to full lane width; reserve lane H as a constant-1 "bias lane"
        # that carries b2 through the second layer (exact: W1 column H is zero).
        Hp = _round_up(H + 1, 128)

        k1, k2 = jax.random.split(key)
        # Reference ("PyTorch-layout transposed") parameters, f32.
        self.w1 = xavier_uniform(k1, 2 * D, H)          # (in, out)
        self.b1 = jnp.zeros((1, H), jnp.float32)
        self.w2 = xavier_uniform(k2, H, 1)              # (in, out)
        self.b2 = jnp.zeros((), jnp.float32)

        # Kernel-ready parameters.
        self._w1_k = (jnp.zeros((2 * D, Hp), jnp.float32)
                      .at[:, :H].set(self.w1)).astype(compute_dtype)
        self._b1_pad = (jnp.zeros((1, Hp), jnp.float32)
                        .at[:, :H].set(self.b1)
                        .at[0, H].set(1.0))                       # bias lane -> 1
        self._w2_row = (jnp.zeros((1, Hp), jnp.float32)
                        .at[:, :H].set(self.w2[:, 0][None, :])
                        .at[0, H].set(self.b2))                   # bias lane -> b2

    def __call__(self, node_emb, node_num, edge, *, edge_tile=8192):
        # edge: [E, 2] int array -> edge_index: [2, E]
        edge_index = jnp.asarray(edge, dtype=jnp.int32).T
        src, dst = edge_index[0], edge_index[1]

        # Mirror torch's node_emb.squeeze(), but fail loudly on ambiguous shapes.
        if node_emb.ndim != 2:
            node_emb = jnp.squeeze(node_emb)
        if node_emb.ndim != 2 or node_emb.shape[-1] != self.input_dim:
            raise ValueError(
                f"node_emb must squeeze to [node_num, {self.input_dim}], "
                f"got shape {node_emb.shape}")

        edge_logits = mlp_edge_logits_pallas(
            node_emb, src, dst, self._w1_k, self._b1_pad, self._w2_row,
            edge_tile=edge_tile, compute_dtype=self.compute_dtype)   # [E, 1]
        return edge_logits, edge_index


def _reference(node_emb2d, edge_index, w1, b1, w2, b2, compute_dtype=jnp.float32):
    # f32 math on inputs rounded to the kernel's compute dtype (matches bf16-MXU
    # with f32 accumulation up to summation-order noise).
    ne = node_emb2d.astype(compute_dtype).astype(jnp.float32)
    w1c = w1.astype(compute_dtype).astype(jnp.float32)
    emb = jnp.concatenate([ne[edge_index[0]], ne[edge_index[1]]], axis=1)
    h = jnp.maximum(
        jnp.dot(emb, w1c, precision=jax.lax.Precision.HIGHEST) + b1, 0.0)
    return jnp.dot(h, w2, precision=jax.lax.Precision.HIGHEST) + b2


if __name__ == "__main__":
    key = jax.random.PRNGKey(0)
    k_param, k_nodes, k_edges, k_nodes2, k_edges2 = jax.random.split(key, 5)

    input_dim = 16      # D
    hidden = 32         # mlp_edge_model_dim
    node_num = 8        # N
    num_edges = 8       # E

    model = MLPPallas(input_dim, hidden, key=k_param)                   # bf16 stream
    model_f32 = MLPPallas(input_dim, hidden, key=k_param,
                          compute_dtype=jnp.float32)                    # exact-mode check

    # node_emb shaped [1, N, D] to mirror the PyTorch .squeeze() path.
    node_emb = jax.random.normal(k_nodes, (1, node_num, input_dim), jnp.float32)
    edge = jax.random.randint(k_edges, (num_edges, 2), 0, node_num, dtype=jnp.int32)

    logits, edge_index = model(node_emb, node_num, edge)
    logits = jax.block_until_ready(logits)
    edge_index = jax.block_until_ready(edge_index)
    assert logits.shape == (num_edges, 1)
    assert edge_index.shape == (2, num_edges)
    ref_bf16 = _reference(node_emb[0], edge_index, model.w1, model.b1, model.w2,
                          model.b2, compute_dtype=jnp.bfloat16)
    np.testing.assert_allclose(np.asarray(logits), np.asarray(ref_bf16),
                               rtol=2e-2, atol=2e-2)

    # Exactness check in float32 compute mode against the f32 reference.
    logits_f32, _ = model_f32(node_emb, node_num, edge)
    logits_f32 = jax.block_until_ready(logits_f32)
    ref_f32 = _reference(node_emb[0], edge_index, model.w1, model.b1, model.w2,
                         model.b2)
    np.testing.assert_allclose(np.asarray(logits_f32), np.asarray(ref_f32),
                               rtol=2e-2, atol=2e-2)

    # Second check: E not a multiple of the tile and >1 grid step (padded/tiled path).
    node_num2, num_edges2 = 12, 200
    node_emb2 = jax.random.normal(k_nodes2, (1, node_num2, input_dim), jnp.float32)
    edge2 = jax.random.randint(k_edges2, (num_edges2, 2), 0, node_num2,
                               dtype=jnp.int32)
    logits2, eidx2 = model(node_emb2, node_num2, edge2, edge_tile=128)   # grid=(2,)
    logits2 = jax.block_until_ready(logits2)
    assert logits2.shape == (num_edges2, 1)
    ref2 = _reference(node_emb2[0], eidx2, model.w1, model.b1, model.w2, model.b2,
                      compute_dtype=jnp.bfloat16)
    np.testing.assert_allclose(np.asarray(logits2), np.asarray(ref2),
                               rtol=2e-2, atol=2e-2)

    print("KERNEL_OK")
</pallas_src>

<mosaic_0001>
module attributes {stable_mosaic.version = 11 : i64} {
  func.func @_mlp_edge_kernel(%arg0: i32, %arg1: memref<128x32xbf16, #tpu.memory_space<vmem>>, %arg2: memref<32x128xbf16, #tpu.memory_space<vmem>>, %arg3: memref<1x128xf32, #tpu.memory_space<vmem>>, %arg4: memref<1x128xf32, #tpu.memory_space<vmem>>, %arg5: memref<1x1x128xf32, #tpu.memory_space<vmem>>) attributes {dimension_semantics = [#tpu.dimension_semantics<parallel>], iteration_bounds = array<i64: 1>, scalar_prefetch = 0 : i64, scratch_operands = 0 : i64, tpu.core_type = #tpu.core_type<tc>, window_params = [{transform_indices = @transform_0, window_bounds = array<i64: 128, 32>}, {pipeline_mode = #tpu.pipeline_mode<synchronous>, transform_indices = @transform_1, window_bounds = array<i64: 32, 128>}, {pipeline_mode = #tpu.pipeline_mode<synchronous>, transform_indices = @transform_2, window_bounds = array<i64: 1, 128>}, {pipeline_mode = #tpu.pipeline_mode<synchronous>, transform_indices = @transform_3, window_bounds = array<i64: 1, 128>}, {transform_indices = @transform_4, window_bounds = array<i64: 1, 1, 128>}]} {
    %c0 = arith.constant 0 : index
    %c0_0 = arith.constant 0 : index
    %0 = vector.load %arg1[%c0, %c0_0] : memref<128x32xbf16, #tpu.memory_space<vmem>>, vector<128x32xbf16>
    %c0_1 = arith.constant 0 : index
    %c0_2 = arith.constant 0 : index
    %1 = vector.load %arg2[%c0_1, %c0_2] : memref<32x128xbf16, #tpu.memory_space<vmem>>, vector<32x128xbf16>
    %cst = arith.constant dense<0.000000e+00> : vector<128x128xf32>
    %2 = tpu.matmul %0, %1, %cst {dimension_numbers = #tpu.dot_dimension_numbers<[1], [0], [0], [1], [0, 0, 1, 1], [], []>} : vector<128x32xbf16>, vector<32x128xbf16>, vector<128x128xf32> -> vector<128x128xf32>
    %c0_3 = arith.constant 0 : index
    %c0_4 = arith.constant 0 : index
    %3 = vector.load %arg3[%c0_3, %c0_4] : memref<1x128xf32, #tpu.memory_space<vmem>>, vector<1x128xf32>
    %4 = vector.broadcast %3 : vector<1x128xf32> to vector<128x128xf32>
    %5 = arith.addf %2, %4 : vector<128x128xf32>
    %cst_5 = arith.constant 0.000000e+00 : f32
    %6 = vector.broadcast %cst_5 : f32 to vector<128x128xf32>
    %7 = arith.maximumf %5, %6 : vector<128x128xf32>
    %c0_6 = arith.constant 0 : index
    %c0_7 = arith.constant 0 : index
    %8 = vector.load %arg4[%c0_6, %c0_7] : memref<1x128xf32, #tpu.memory_space<vmem>>, vector<1x128xf32>
    %9 = vector.broadcast %8 : vector<1x128xf32> to vector<128x128xf32>
    %10 = arith.mulf %7, %9 : vector<128x128xf32>
    %cst_8 = arith.constant dense<0.000000e+00> : vector<128xf32>
    %11 = vector.multi_reduction <add>, %10, %cst_8 [1] : vector<128x128xf32> to vector<128xf32>
    %12 = vector.shape_cast %11 : vector<128xf32> to vector<1x1x128xf32>
    %c0_9 = arith.constant 0 : index
    %c0_10 = arith.constant 0 : index
    %c0_11 = arith.constant 0 : index
    %13 = vector.load %arg5[%c0_9, %c0_10, %c0_11] : memref<1x1x128xf32, #tpu.memory_space<vmem>>, vector<1x1x128xf32>
    tpu.vector_store %arg5[%c0_9, %c0_10, %c0_11], %12 {strides = array<i32>} : memref<1x1x128xf32, #tpu.memory_space<vmem>>, vector<1x1x128xf32>,
    return
  }
  func.func @transform_0(%arg0: i32) -> (i32, i32) {
    %c0_i32 = arith.constant 0 : i32
    %c0_i32_0 = arith.constant 0 : i32
    return %arg0, %c0_i32 : i32, i32
  }
  func.func @transform_1(%arg0: i32) -> (i32, i32) {
    %c0_i32 = arith.constant 0 : i32
    %c0_i32_0 = arith.constant 0 : i32
    %c0_i32_1 = arith.constant 0 : i32
    return %c0_i32, %c0_i32_0 : i32, i32
  }
  func.func @transform_2(%arg0: i32) -> (i32, i32) {
    %c0_i32 = arith.constant 0 : i32
    %c0_i32_0 = arith.constant 0 : i32
    %c0_i32_1 = arith.constant 0 : i32
    return %c0_i32, %c0_i32_0 : i32, i32
  }
  func.func @transform_3(%arg0: i32) -> (i32, i32) {
    %c0_i32 = arith.constant 0 : i32
    %c0_i32_0 = arith.constant 0 : i32
    %c0_i32_1 = arith.constant 0 : i32
    return %c0_i32, %c0_i32_0 : i32, i32
  }
  func.func @transform_4(%arg0: i32) -> (i32, i32, i32) {
    %c0_i32 = arith.constant 0 : i32
    %c0_i32_0 = arith.constant 0 : i32
    %c0_i32_1 = arith.constant 0 : i32
    return %arg0, %c0_i32, %c0_i32_0 : i32, i32, i32
  }
}

</mosaic_0001>

<llo_original>
// kernel: mlp_edge_logits_pallas.1
$region0: #{mlp_edge_logits_pallas.1}
  #allocation0 [shape = 'u32[]', space=smem, size = 0x4, offset = 0x4, fixed_abs, tag = 'smem constant byte address 0x4 - core index']
  #allocation1 [shape = 'u32[144,128]{1,0:T(1,128)}', space=vmem, size = 0x12000, scoped, tag = 'internal scratch']
  %s0 = inlined_call_operand.vmem [shape: bf16[128,32], index: 0, kind: input, shape index: {}]
  %s1 = inlined_call_operand.vmem [shape: bf16[32,128], index: 1, kind: input, shape index: {}]
  %s2 = inlined_call_operand.vmem [shape: f32[1,128], index: 2, kind: input, shape index: {}]
  %s3 = inlined_call_operand.vmem [shape: f32[1,128], index: 3, kind: input, shape index: {}]
  %s4 = inlined_call_operand.vmem [shape: f32[1,1,128], index: 4, kind: output, shape index: {}]
  %s5 = sld [smem:[#allocation0]]
  $region26: #{mlp_edge_logits_pallas.1} parent=0
    _
  %s7 = ssub.s32 1, %s5
  %s8 = scalar_select 0, %s7, %s5
  // Predicated region
  $region2: #{mlp_edge_logits_pallas.1} parent=0 // pred_check
    _
  $region3: #{mlp_edge_logits_pallas.1} parent=0 // pred_check_branch
    %10 = sbr.rel (0) target = $region5
  $region4: #{mlp_edge_logits_pallas.1} parent=0 // pred_region
    _
  $region5: #{mlp_edge_logits_pallas.1} parent=0 // pred_fallthru
    _
  // Predicated region
  $region6: #{mlp_edge_logits_pallas.1} parent=0 // pred_check
    _
  $region7: #{mlp_edge_logits_pallas.1} parent=0 // pred_check_branch
    %12 = sbr.rel (0) target = $region9
  $region8: #{mlp_edge_logits_pallas.1} parent=0 // pred_region
    _
  $region9: #{mlp_edge_logits_pallas.1} parent=0 // pred_fallthru
    _
  // Predicated region
  $region10: #{mlp_edge_logits_pallas.1} parent=0 // pred_check
    _
  $region11: #{mlp_edge_logits_pallas.1} parent=0 // pred_check_branch
    %14 = sbr.rel (0) target = $region13
  $region12: #{mlp_edge_logits_pallas.1} parent=0 // pred_region
    _
  $region13: #{mlp_edge_logits_pallas.1} parent=0 // pred_fallthru
    _
  // Predicated region
  $region14: #{mlp_edge_logits_pallas.1} parent=0 // pred_check
    _
  $region15: #{mlp_edge_logits_pallas.1} parent=0 // pred_check_branch
    %16 = sbr.rel (0) target = $region17
  $region16: #{mlp_edge_logits_pallas.1} parent=0 // pred_region
    _
  $region17: #{mlp_edge_logits_pallas.1} parent=0 // pred_fallthru
    _
  %v18 = vld [vmem:[%s0] sm:$0xf]
  %v19 = vld [vmem:[%s0 + $0x4] sm:$0xf]
  %v20 = vld [vmem:[%s0 + $0x8] sm:$0xf]
  %v21 = vld [vmem:[%s0 + $0xc] sm:$0xf]
  %v22 = vld [vmem:[%s0 + $0x10] sm:$0xf]
  %v23 = vld [vmem:[%s0 + $0x14] sm:$0xf]
  %v24 = vld [vmem:[%s0 + $0x18] sm:$0xf]
  %v25 = vld [vmem:[%s0 + $0x1c] sm:$0xf]
  %v26 = vld [vmem:[%s0 + $0x20] sm:$0xf]
  %v27 = vld [vmem:[%s0 + $0x24] sm:$0xf]
  %v28 = vld [vmem:[%s0 + $0x28] sm:$0xf]
  %v29 = vld [vmem:[%s0 + $0x2c] sm:$0xf]
  %v30 = vld [vmem:[%s0 + $0x30] sm:$0xf]
  %v31 = vld [vmem:[%s0 + $0x34] sm:$0xf]
  %v32 = vld [vmem:[%s0 + $0x38] sm:$0xf]
  %v33 = vld [vmem:[%s0 + $0x3c] sm:$0xf]
  %v34 = vld [vmem:[%s1] sm:$0xf]
  %v35 = vld [vmem:[%s1 + $0x4] sm:$0xf]
  %v36 = vld [vmem:[%s1 + $0x8] sm:$0xf]
  %v37 = vld [vmem:[%s1 + $0xc] sm:$0xf]
  %v38 = vld [vmem:[%s2] sm:$0x1]
  %v40 = vlaneseq
  %v41 = vshrl.u32 %v40, 7
  %v42 = vsub.s32 0, %v41
  %v43 = vrot.slane %v38, %v42
  %v61 = vunpack.c.l.b16 %v18
  %v62 = vunpack.c.l.b16 %v19
  %v63 = vunpack.c.l.b16 %v20
  %v64 = vunpack.c.l.b16 %v21
  %v65 = vunpack.c.l.b16 %v22
  %v66 = vunpack.c.l.b16 %v23
  %v67 = vunpack.c.l.b16 %v24
  %v68 = vunpack.c.l.b16 %v25
  %v69 = vunpack.c.l.b16 %v26
  %v70 = vunpack.c.l.b16 %v27
  %v71 = vunpack.c.l.b16 %v28
  %v72 = vunpack.c.l.b16 %v29
  %v73 = vunpack.c.l.b16 %v30
  %v74 = vunpack.c.l.b16 %v31
  %v75 = vunpack.c.l.b16 %v32
  %v76 = vunpack.c.l.b16 %v33
  %v77 = vpack.c.b16 %v62, %v61
  %v78 = vpack.c.b16 %v64, %v63
  %v79 = vpack.c.b16 %v66, %v65
  %v80 = vpack.c.b16 %v68, %v67
  %v81 = vpack.c.b16 %v70, %v69
  %v82 = vpack.c.b16 %v72, %v71
  %v83 = vpack.c.b16 %v74, %v73
  %v84 = vpack.c.b16 %v76, %v75
  %v89 = vunpack.c.l.b16 %v34
  %v90 = vunpack.c.l.b16 %v35
  %v91 = vunpack.c.l.b16 %v36
  %v92 = vunpack.c.l.b16 %v37
  %v93 = vpack.c.b16 %v90, %v89
  %v94 = vpack.c.b16 %v92, %v91
  %vm97 = vcmask 261120
  %v99 = vsel %vm97, %v77, 0
  %v102 = vsel %vm97, %v78, 0
  %v105 = vsel %vm97, %v79, 0
  %v108 = vsel %vm97, %v80, 0
  %v111 = vsel %vm97, %v81, 0
  %v114 = vsel %vm97, %v82, 0
  %v117 = vsel %vm97, %v83, 0
  %v120 = vsel %vm97, %v84, 0
  %122 = vmatprep.subr.bf16.mxu0 0
  %123 = vmatpush1.bf16.msra.mxu0 %v93
  %124 = vmatprep.subr.bf16.mxu0 0
  %125 = vmatpush1.bf16.msra.mxu0 %v94
  %126 = vmatprep.subr.bf16.mxu0 0
  %127 = vmatpush1.bf16.msra.mxu0 0
  %128 = vmatprep.subr.bf16.mxu0 0
  %129 = vmatpush1.bf16.msra.mxu0 0
  %130 = vmatprep.subr.bf16.mxu0 0
  %131 = vmatpush1.bf16.msra.mxu0 0
  %132 = vmatprep.subr.bf16.mxu0 0
  %133 = vmatpush1.bf16.msra.mxu0 0
  %134 = vmatprep.subr.bf16.mxu0 0
  %135 = vmatpush1.bf16.msra.mxu0 0
  %136 = vmatprep.subr.bf16.mxu0 0
  %137 = vmatpush1.bf16.msra.mxu0 0
  %138 = vmatprep.subr.bf16.mxu0 0
  %139 = vmatpush1.bf16.msra.mxu0 0
  %140 = vmatprep.subr.bf16.mxu0 0
  %141 = vmatpush1.bf16.msra.mxu0 0
  %142 = vmatprep.subr.bf16.mxu0 0
  %143 = vmatpush1.bf16.msra.mxu0 0
  %144 = vmatprep.subr.bf16.mxu0 0
  %145 = vmatpush1.bf16.msra.mxu0 0
  %146 = vmatprep.subr.bf16.mxu0 0
  %147 = vmatpush1.bf16.msra.mxu0 0
  %148 = vmatprep.subr.bf16.mxu0 0
  %149 = vmatpush1.bf16.msra.mxu0 0
  %150 = vmatprep.subr.bf16.mxu0 0
  %151 = vmatpush1.bf16.msra.mxu0 0
  %152 = vmatprep.subr.bf16.mxu0 0
  %153 = vmatpush1.bf16.msra.mxu0 0
  %154 = vmatprep.mubr.bf16.mxu0 0
  %155 = vmatmul.mubr.bf16.gmra.mrb[0].mxu0 %v99
  %v156 = vpop.f32.mrb[0].mxu0
  %v157 = vadd.f32 %v43, %v156
  %v158 = vpop.f32.mrb[0].mxu0
  %v159 = vpop.f32.mrb[0].mxu0
  %v160 = vadd.f32 %v43, %v159
  %v161 = vpop.f32.mrb[0].mxu0
  %162 = vmatprep.mubr.bf16.mxu0 0
  %163 = vmatmul.mubr.bf16.gmra.mrb[0].mxu0 %v102
  %v164 = vpop.f32.mrb[0].mxu0
  %v165 = vadd.f32 %v43, %v164
  %v166 = vpop.f32.mrb[0].mxu0
  %v167 = vpop.f32.mrb[0].mxu0
  %v168 = vadd.f32 %v43, %v167
  %v169 = vpop.f32.mrb[0].mxu0
  %170 = vmatprep.mubr.bf16.mxu0 0
  %171 = vmatmul.mubr.bf16.gmra.mrb[0].mxu0 %v105
  %v172 = vpop.f32.mrb[0].mxu0
  %v173 = vadd.f32 %v43, %v172
  %v174 = vpop.f32.mrb[0].mxu0
  %v175 = vpop.f32.mrb[0].mxu0
  %v176 = vadd.f32 %v43, %v175
  %v177 = vpop.f32.mrb[0].mxu0
  %178 = vmatprep.mubr.bf16.mxu0 0
  %179 = vmatmul.mubr.bf16.gmra.mrb[0].mxu0 %v108
  %v180 = vpop.f32.mrb[0].mxu0
  %v181 = vadd.f32 %v43, %v180
  %v182 = vpop.f32.mrb[0].mxu0
  %v183 = vpop.f32.mrb[0].mxu0
  %v184 = vadd.f32 %v43, %v183
  %v185 = vpop.f32.mrb[0].mxu0
  %186 = vmatprep.mubr.bf16.mxu0 0
  %187 = vmatmul.mubr.bf16.gmra.mrb[0].mxu0 %v111
  %v188 = vpop.f32.mrb[0].mxu0
  %v189 = vadd.f32 %v43, %v188
  %v190 = vpop.f32.mrb[0].mxu0
  %v191 = vpop.f32.mrb[0].mxu0
  %v192 = vadd.f32 %v43, %v191
  %v193 = vpop.f32.mrb[0].mxu0
  %194 = vmatprep.mubr.bf16.mxu0 0
  %195 = vmatmul.mubr.bf16.gmra.mrb[0].mxu0 %v114
  %v196 = vpop.f32.mrb[0].mxu0
  %v197 = vadd.f32 %v43, %v196
  %v198 = vpop.f32.mrb[0].mxu0
  %v199 = vpop.f32.mrb[0].mxu0
  %v200 = vadd.f32 %v43, %v199
  %v201 = vpop.f32.mrb[0].mxu0
  %202 = vmatprep.mubr.bf16.mxu0 0
  %203 = vmatmul.mubr.bf16.gmra.mrb[0].mxu0 %v117
  %v204 = vpop.f32.mrb[0].mxu0
  %v205 = vadd.f32 %v43, %v204
  %v206 = vpop.f32.mrb[0].mxu0
  %v207 = vpop.f32.mrb[0].mxu0
  %v208 = vadd.f32 %v43, %v207
  %v209 = vpop.f32.mrb[0].mxu0
  %210 = vmatprep.mubr.bf16.mxu0 0
  %211 = vmatmul.mubr.bf16.gmra.mrb[0].mxu0 %v120
  %v212 = vpop.f32.mrb[0].mxu0
  %v213 = vadd.f32 %v43, %v212
  %v214 = vpop.f32.mrb[0].mxu0
  %v215 = vpop.f32.mrb[0].mxu0
  %v216 = vadd.f32 %v43, %v215
  %v217 = vpop.f32.mrb[0].mxu0
  %218 = vdwg.mxu0
  %v219 = vmax.f32 %v157, 0.0
  %v220 = vmax.f32 %v160, 0.0
  %v221 = vmax.f32 %v165, 0.0
  %v222 = vmax.f32 %v168, 0.0
  %v223 = vmax.f32 %v173, 0.0
  %v224 = vmax.f32 %v176, 0.0
  %v225 = vmax.f32 %v181, 0.0
  %v226 = vmax.f32 %v184, 0.0
  %v227 = vmax.f32 %v189, 0.0
  %v228 = vmax.f32 %v192, 0.0
  %v229 = vmax.f32 %v197, 0.0
  %v230 = vmax.f32 %v200, 0.0
  %v231 = vmax.f32 %v205, 0.0
  %v232 = vmax.f32 %v208, 0.0
  %v233 = vmax.f32 %v213, 0.0
  %v234 = vmax.f32 %v216, 0.0
  %v235 = vld [vmem:[%s3] sm:$0x1]
  %v237 = vlaneseq
  %v238 = vshrl.u32 %v237, 7
  %v239 = vsub.s32 0, %v238
  %v240 = vrot.slane %v235, %v239
  %v242 = vmul.f32 %v219, %v240
  %v243 = vmul.f32 %v220, %v240
  %v244 = vmul.f32 %v221, %v240
  %v245 = vmul.f32 %v222, %v240
  %v246 = vmul.f32 %v223, %v240
  %v247 = vmul.f32 %v224, %v240
  %v248 = vmul.f32 %v225, %v240
  %v249 = vmul.f32 %v226, %v240
  %v250 = vmul.f32 %v227, %v240
  %v251 = vmul.f32 %v228, %v240
  %v252 = vmul.f32 %v229, %v240
  %v253 = vmul.f32 %v230, %v240
  %v254 = vmul.f32 %v231, %v240
  %v255 = vmul.f32 %v232, %v240
  %v256 = vmul.f32 %v233, %v240
  %v257 = vmul.f32 %v234, %v240
  %258 = vadd.xlane.f32.xlu0 %v242
  %v259 = vpop.xlane.xlu0 %258
  %260 = vadd.xlane.f32.xlu0 %v243
  %v261 = vpop.xlane.xlu0 %260
  %262 = vadd.xlane.f32.xlu0 %v244
  %v263 = vpop.xlane.xlu0 %262
  %264 = vadd.xlane.f32.xlu0 %v245
  %v265 = vpop.xlane.xlu0 %264
  %266 = vadd.xlane.f32.xlu0 %v246
  %v267 = vpop.xlane.xlu0 %266
  %268 = vadd.xlane.f32.xlu0 %v247
  %v269 = vpop.xlane.xlu0 %268
  %270 = vadd.xlane.f32.xlu0 %v248
  %v271 = vpop.xlane.xlu0 %270
  %272 = vadd.xlane.f32.xlu0 %v249
  %v273 = vpop.xlane.xlu0 %272
  %274 = vadd.xlane.f32.xlu0 %v250
  %v275 = vpop.xlane.xlu0 %274
  %276 = vadd.xlane.f32.xlu0 %v251
  %v277 = vpop.xlane.xlu0 %276
  %278 = vadd.xlane.f32.xlu0 %v252
  %v279 = vpop.xlane.xlu0 %278
  %280 = vadd.xlane.f32.xlu0 %v253
  %v281 = vpop.xlane.xlu0 %280
  %282 = vadd.xlane.f32.xlu0 %v254
  %v283 = vpop.xlane.xlu0 %282
  %284 = vadd.xlane.f32.xlu0 %v255
  %v285 = vpop.xlane.xlu0 %284
  %286 = vadd.xlane.f32.xlu0 %v256
  %v287 = vpop.xlane.xlu0 %286
  %288 = vadd.xlane.f32.xlu0 %v257
  %v289 = vpop.xlane.xlu0 %288
  %v306 = vlaneseq
  %v307 = vand.u32 %v306, 127
  %v308 = vlaneseq
  %v309 = vshrl.u32 %v308, 7
  %v310 = vsub.s32 %v307, %v309
  %v311 = vrot.slane %v259, %v310
  %v312 = vadd.s32 %v307, 4294967288
  %v313 = vlaneseq
  %v314 = vshrl.u32 %v313, 7
  %v315 = vsub.s32 %v312, %v314
  %v316 = vrot.slane %v261, %v315
  %vm317 = vcmask 130112
  %v318 = vsel %vm317, %v316, %v311
  %v319 = vadd.s32 %v307, 4294967280
  %v320 = vlaneseq
  %v321 = vshrl.u32 %v320, 7
  %v322 = vsub.s32 %v319, %v321
  %v323 = vrot.slane %v263, %v322
  %vm324 = vcmask 195712
  %v325 = vsel %vm324, %v323, %v318
  %v326 = vadd.s32 %v307, 4294967272
  %v327 = vlaneseq
  %v328 = vshrl.u32 %v327, 7
  %v329 = vsub.s32 %v326, %v328
  %v330 = vrot.slane %v265, %v329
  %vm331 = vcmask 261312
  %v332 = vsel %vm331, %v330, %v325
  %v333 = vadd.s32 %v307, 4294967264
  %v334 = vlaneseq
  %v335 = vshrl.u32 %v334, 7
  %v336 = vsub.s32 %v333, %v335
  %v337 = vrot.slane %v267, %v336
  %vm338 = vcmask 326912
  %v339 = vsel %vm338, %v337, %v332
  %v340 = vadd.s32 %v307, 4294967256
  %v341 = vlaneseq
  %v342 = vshrl.u32 %v341, 7
  %v343 = vsub.s32 %v340, %v342
  %v344 = vrot.slane %v269, %v343
  %vm345 = vcmask 392512
  %v346 = vsel %vm345, %v344, %v339
  %v347 = vadd.s32 %v307, 4294967248
  %v348 = vlaneseq
  %v349 = vshrl.u32 %v348, 7
  %v350 = vsub.s32 %v347, %v349
  %v351 = vrot.slane %v271, %v350
  %vm352 = vcmask 458112
  %v353 = vsel %vm352, %v351, %v346
  %v354 = vadd.s32 %v307, 4294967240
  %v355 = vlaneseq
  %v356 = vshrl.u32 %v355, 7
  %v357 = vsub.s32 %v354, %v356
  %v358 = vrot.slane %v273, %v357
  %vm359 = vcmask 523712
  %v360 = vsel %vm359, %v358, %v353
  %v361 = vadd.s32 %v307, 4294967232
  %v362 = vlaneseq
  %v363 = vshrl.u32 %v362, 7
  %v364 = vsub.s32 %v361, %v363
  %v365 = vrot.slane %v275, %v364
  %vm366 = vcmask 589312
  %v367 = vsel %vm366, %v365, %v360
  %v368 = vadd.s32 %v307, 4294967224
  %v369 = vlaneseq
  %v370 = vshrl.u32 %v369, 7
  %v371 = vsub.s32 %v368, %v370
  %v372 = vrot.slane %v277, %v371
  %vm373 = vcmask 654912
  %v374 = vsel %vm373, %v372, %v367
  %v375 = vadd.s32 %v307, 4294967216
  %v376 = vlaneseq
  %v377 = vshrl.u32 %v376, 7
  %v378 = vsub.s32 %v375, %v377
  %v379 = vrot.slane %v279, %v378
  %vm380 = vcmask 720512
  %v381 = vsel %vm380, %v379, %v374
  %v382 = vadd.s32 %v307, 4294967208
  %v383 = vlaneseq
  %v384 = vshrl.u32 %v383, 7
  %v385 = vsub.s32 %v382, %v384
  %v386 = vrot.slane %v281, %v385
  %vm387 = vcmask 786112
  %v388 = vsel %vm387, %v386, %v381
  %v389 = vadd.s32 %v307, 4294967200
  %v390 = vlaneseq
  %v391 = vshrl.u32 %v390, 7
  %v392 = vsub.s32 %v389, %v391
  %v393 = vrot.slane %v283, %v392
  %vm394 = vcmask 851712
  %v395 = vsel %vm394, %v393, %v388
  %v396 = vadd.s32 %v307, 4294967192
  %v397 = vlaneseq
  %v398 = vshrl.u32 %v397, 7
  %v399 = vsub.s32 %v396, %v398
  %v400 = vrot.slane %v285, %v399
  %vm401 = vcmask 917312
  %v402 = vsel %vm401, %v400, %v395
  %v403 = vadd.s32 %v307, 4294967184
  %v404 = vlaneseq
  %v405 = vshrl.u32 %v404, 7
  %v406 = vsub.s32 %v403, %v405
  %v407 = vrot.slane %v287, %v406
  %vm408 = vcmask 982912
  %v409 = vsel %vm408, %v407, %v402
  %v410 = vadd.s32 %v307, 4294967176
  %v411 = vlaneseq
  %v412 = vshrl.u32 %v411, 7
  %v413 = vsub.s32 %v410, %v412
  %v414 = vrot.slane %v289, %v413
  %vm415 = vcmask 1048512
  %v416 = vsel %vm415, %v414, %v409
  %418 = vst [vmem:[%s4] sm:$0x1] %v416
  // Predicated region
  $region18: #{mlp_edge_logits_pallas.1} parent=0 // pred_check
    _
  $region19: #{mlp_edge_logits_pallas.1} parent=0 // pred_check_branch
    %420 = sbr.rel (0) target = $region21
  $region20: #{mlp_edge_logits_pallas.1} parent=0 // pred_region
    _
  $region21: #{mlp_edge_logits_pallas.1} parent=0 // pred_fallthru
    _
  // Predicated region
  $region22: #{mlp_edge_logits_pallas.1} parent=0 // pred_check
    _
  $region23: #{mlp_edge_logits_pallas.1} parent=0 // pred_check_branch
    %422 = sbr.rel (0) target = $region25
  $region24: #{mlp_edge_logits_pallas.1} parent=0 // pred_region
    _
  $region25: #{mlp_edge_logits_pallas.1} parent=0 // pred_fallthru
    _

</llo_original>
